<compile_context>
chip_gen: v7x
topology: tpu7x:2x2x1
jax: 0.10.0
libtpu: 0.0.40
codegen_flags: <defaults>
</compile_context>

<pallas_src>
import math
from functools import partial

import jax
import jax.numpy as jnp
from jax import lax
from jax.experimental import pallas as pl
from jax.experimental.pallas import tpu as pltpu

_NEG_BIG = -1e30  # large finite negative: avoids NaN on fully-masked rows


def _softmax_rows(scores, o_ref):
    """Numerically-stable softmax over the last axis; writes to o_ref[0]."""
    s_max = jnp.max(scores, axis=-1, keepdims=True)
    e = jnp.exp(scores - s_max)
    denom = jnp.sum(e, axis=-1, keepdims=True)
    o_ref[0] = (e * pl.reciprocal(denom, approx=True)).astype(o_ref.dtype)


def _scores(q_ref, k_ref):
    d = q_ref.shape[-1]
    inv_scale = 1.0 / math.sqrt(float(d))
    # Fold 1/sqrt(D) into the small (TL, D) q tile; native dtype into the MXU,
    # f32 accumulate via preferred_element_type.
    q = q_ref[0] * inv_scale                      # (TL, D)
    k = k_ref[0]                                  # (S,  D)
    return lax.dot_general(
        q, k,
        dimension_numbers=(((1,), (1,)), ((), ())),
        preferred_element_type=jnp.float32,
    )                                             # (TL, S) f32


def _attn_kernel_masked(q_ref, k_ref, m_ref, o_ref):
    # q_ref: (1, TL, D)  k_ref: (1, S, D)  m_ref: (1, TL, S)  o_ref: (1, TL, S)
    scores = _scores(q_ref, k_ref)
    m = m_ref[0]
    keep = m if m.dtype == jnp.bool_ else (m != 0)
    scores = jnp.where(keep, scores, _NEG_BIG)
    _softmax_rows(scores, o_ref)


def _attn_kernel_nomask(q_ref, k_ref, o_ref):
    _softmax_rows(_scores(q_ref, k_ref), o_ref)


@partial(jax.jit, static_argnames=("block_l", "out_dtype"))
def scaled_dot_product_attn(q, k, v=None, mask=None, *, block_l=None,
                            out_dtype=None):
    """Returns {'attentions': (B, N, L, S)} matching the torch module.

    `v` is accepted for signature parity but unused (the module only returns
    the attention matrix).  `mask` may be None or any shape broadcastable as
    (B|1, N|1, L, S).  Pass out_dtype=jnp.bfloat16 to halve output HBM bytes.
    """
    del v
    B, N, L, D = q.shape
    S = k.shape[2]
    BN = B * N

    if out_dtype is None:
        out_dtype = jnp.promote_types(q.dtype, k.dtype)

    q_bytes = jnp.dtype(q.dtype).itemsize
    k_bytes = jnp.dtype(k.dtype).itemsize
    o_bytes = jnp.dtype(out_dtype).itemsize

    # Collapse (B, N) -> BN; contiguous reshape, free at the XLA level.
    qf = q.reshape(BN, L, D)
    kf = k.reshape(BN, S, D)

    # ---- mask handling: never expand, never pad, never widen 1-byte dtypes.
    mask_f = None
    m_index_map = None
    if mask is not None:
        assert mask.ndim == 4 and mask.shape[2] == L and mask.shape[3] == S, (
            "mask must be (B|1, N|1, L, S)")
        mB, mN = int(mask.shape[0]), int(mask.shape[1])
        assert mB in (1, B) and mN in (1, N), "mask batch/head dims must be 1 or full"
        mask_f = mask.reshape(mB * mN, L, S)
        if mask_f.dtype.itemsize != 1:          # bool/int8/uint8 pass through
            mask_f = mask_f.astype(jnp.bool_)
        if mB * mN == 1:
            m_index_map = lambda bn, li: (0, li, 0)
        elif mB == B and mN == N:
            m_index_map = lambda bn, li: (bn, li, 0)
        else:
            def m_index_map(bn, li):
                b, n = bn // N, bn % N
                return ((b % mB) * mN + (n % mN), li, 0)

    # ---- per-chip VMEM-aware L-tile sizing (honest estimate).
    try:
        vmem_cap = pltpu.get_tpu_info().vmem_capacity_bytes
    except Exception:
        vmem_cap = 64 * 1024 * 1024             # conservative (v7x per-TC)
    vmem_limit = max(32 * 2**20, min(int(vmem_cap * 0.84), vmem_cap - 12 * 2**20))
    budget = max(16 * 2**20, vmem_limit - 4 * 2**20)

    fixed = 2 * S * D * k_bytes                 # double-buffered resident K tile
    per_tl = (2 * D * q_bytes                   # double-buffered q rows
              + 2 * S * o_bytes                 # double-buffered out rows
              + 3 * S * 4)                      # in-kernel f32 temporaries
    if mask is not None:
        per_tl += 2 * S * 1                     # double-buffered 1-byte mask rows
    tl_cap = max(8, ((budget - fixed) // per_tl) // 8 * 8)

    if block_l is None:
        block_l = 1024 if vmem_cap >= 96 * 2**20 else 512
    TL = max(8, (int(min(block_l, tl_cap)) // 8) * 8)
    if L <= TL:
        TL = L                                  # full-extent block: always legal

    grid = (BN, pl.cdiv(L, TL))                 # ragged last L-block handled by Pallas

    q_spec = pl.BlockSpec((1, TL, D), lambda bn, li: (bn, li, 0))
    # K index is constant over the L axis -> block stays resident, no re-DMA.
    k_spec = pl.BlockSpec((1, S, D), lambda bn, li: (bn, 0, 0))
    o_spec = pl.BlockSpec((1, TL, S), lambda bn, li: (bn, li, 0))

    compiler_params = pltpu.CompilerParams(
        # BN axis parallel (megacore shards here on v7x, each core keeps its
        # own K resident); L axis arbitrary (sequential streaming per core).
        dimension_semantics=("parallel", "arbitrary"),
        vmem_limit_bytes=int(vmem_limit),
    )
    out_shape = jax.ShapeDtypeStruct((BN, L, S), out_dtype)

    if mask is None:
        attns = pl.pallas_call(
            _attn_kernel_nomask,
            out_shape=out_shape,
            grid_spec=pltpu.PrefetchScalarGridSpec(
                num_scalar_prefetch=0, grid=grid,
                in_specs=[q_spec, k_spec],
                out_specs=o_spec),
            compiler_params=compiler_params,
        )(qf, kf)
    else:
        m_spec = pl.BlockSpec((1, TL, S), m_index_map)
        attns = pl.pallas_call(
            _attn_kernel_masked,
            out_shape=out_shape,
            grid_spec=pltpu.PrefetchScalarGridSpec(
                num_scalar_prefetch=0, grid=grid,
                in_specs=[q_spec, k_spec, m_spec],
                out_specs=o_spec),
            compiler_params=compiler_params,
        )(qf, kf, mask_f)

    return {"attentions": attns.reshape(B, N, L, S)}


def _reference(q, k, mask):
    scale = math.sqrt(k.shape[-1])
    strens = jnp.einsum("bnld,bnsd->bnls", q, k) / scale
    if mask is not None:
        strens = jnp.where(mask, strens, -jnp.inf)
    return jax.nn.softmax(strens, axis=-1)


if __name__ == "__main__":
    key = jax.random.PRNGKey(0)
    kq, kk, kv = jax.random.split(key, 3)

    B, N, L, S, D = 2, 2, 8, 8, 32
    q = jax.random.normal(kq, (B, N, L, D), dtype=jnp.float32)
    k = jax.random.normal(kk, (B, N, S, D), dtype=jnp.float32)
    # v is accepted by the torch forward but unused in the returned dict.
    v = jax.random.normal(kv, (B, N, S, D), dtype=jnp.float32)

    causal = jnp.tril(jnp.ones((L, S), dtype=jnp.bool_))

    # 1) full (B, N, L, S) boolean mask (1-byte pass-through path).
    mask_full = jnp.broadcast_to(causal[None, None], (B, N, L, S))
    out_full = jax.block_until_ready(
        scaled_dot_product_attn(q, k, v, mask_full)["attentions"])
    ref_full = _reference(q, k, mask_full)
    assert out_full.shape == (B, N, L, S)
    err = float(jnp.max(jnp.abs(out_full - ref_full)))
    assert bool(jnp.allclose(out_full, ref_full, atol=2e-3, rtol=2e-3)), err

    # 2) broadcastable (1, 1, L, S) mask -- never expanded on the host side.
    mask_bcast = causal[None, None]
    out_b = jax.block_until_ready(
        scaled_dot_product_attn(q, k, v, mask_bcast)["attentions"])
    err_b = float(jnp.max(jnp.abs(out_b - ref_full)))
    assert bool(jnp.allclose(out_b, ref_full, atol=2e-3, rtol=2e-3)), err_b

    # 3) mask=None fast path (no mask traffic, no jnp.where).
    out_n = jax.block_until_ready(
        scaled_dot_product_attn(q, k, v, None)["attentions"])
    ref_n = _reference(q, k, None)
    err_n = float(jnp.max(jnp.abs(out_n - ref_n)))
    assert bool(jnp.allclose(out_n, ref_n, atol=2e-3, rtol=2e-3)), err_n

    print("KERNEL_OK")
</pallas_src>

<mosaic_0001>
module attributes {stable_mosaic.version = 11 : i64} {
  func.func @_attn_kernel_masked(%arg0: i32, %arg1: i32, %arg2: memref<1x8x32xf32, #tpu.memory_space<vmem>>, %arg3: memref<1x8x32xf32, #tpu.memory_space<vmem>>, %arg4: memref<1x8x8xi32, #tpu.memory_space<vmem>>, %arg5: memref<1x8x8xf32, #tpu.memory_space<vmem>>) attributes {dimension_semantics = [#tpu.dimension_semantics<parallel>, #tpu.dimension_semantics<arbitrary>], iteration_bounds = array<i64: 4, 1>, scalar_prefetch = 0 : i64, scratch_operands = 0 : i64, tpu.core_type = #tpu.core_type<tc>, window_params = [{transform_indices = @transform_0, window_bounds = array<i64: 1, 8, 32>}, {transform_indices = @transform_1, window_bounds = array<i64: 1, 8, 32>}, {transform_indices = @transform_2, window_bounds = array<i64: 1, 8, 8>}, {transform_indices = @transform_3, window_bounds = array<i64: 1, 8, 8>}]} {
    %c0 = arith.constant 0 : index
    %c0_0 = arith.constant 0 : index
    %c0_1 = arith.constant 0 : index
    %0 = vector.load %arg2[%c0, %c0_0, %c0_1] : memref<1x8x32xf32, #tpu.memory_space<vmem>>, vector<1x8x32xf32>
    %1 = vector.shape_cast %0 : vector<1x8x32xf32> to vector<8x32xf32>
    %cst = arith.constant 0.176776692 : f32
    %2 = vector.broadcast %cst : f32 to vector<8x32xf32>
    %3 = arith.mulf %1, %2 : vector<8x32xf32>
    %c0_2 = arith.constant 0 : index
    %c0_3 = arith.constant 0 : index
    %c0_4 = arith.constant 0 : index
    %4 = vector.load %arg3[%c0_2, %c0_3, %c0_4] : memref<1x8x32xf32, #tpu.memory_space<vmem>>, vector<1x8x32xf32>
    %5 = vector.shape_cast %4 : vector<1x8x32xf32> to vector<8x32xf32>
    %cst_5 = arith.constant dense<0.000000e+00> : vector<8x8xf32>
    %6 = tpu.matmul %3, %5, %cst_5 {dimension_numbers = #tpu.dot_dimension_numbers<[1], [1], [0], [0], [0, 0, 1, 0], [], []>} : vector<8x32xf32>, vector<8x32xf32>, vector<8x8xf32> -> vector<8x8xf32>
    %c0_6 = arith.constant 0 : index
    %c0_7 = arith.constant 0 : index
    %c0_8 = arith.constant 0 : index
    %7 = vector.load %arg4[%c0_6, %c0_7, %c0_8] : memref<1x8x8xi32, #tpu.memory_space<vmem>>, vector<1x8x8xi32>
    %8 = vector.shape_cast %7 : vector<1x8x8xi32> to vector<8x8xi32>
    %cst_9 = arith.constant dense<0> : vector<8x8xi32>
    %9 = arith.cmpi ne, %8, %cst_9 : vector<8x8xi32>
    %cst_10 = arith.constant -1.000000e+30 : f32
    %10 = vector.broadcast %cst_10 : f32 to vector<8x8xf32>
    %11 = arith.select %9, %6, %10 : vector<8x8xi1>, vector<8x8xf32>
    %cst_11 = arith.constant dense<0xFF800000> : vector<8xf32>
    %12 = vector.multi_reduction <maximumf>, %11, %cst_11 [1] : vector<8x8xf32> to vector<8xf32>
    %13 = vector.shape_cast %12 : vector<8xf32> to vector<8x1xf32>
    %14 = vector.broadcast %13 : vector<8x1xf32> to vector<8x8xf32>
    %15 = arith.subf %11, %14 : vector<8x8xf32>
    %16 = math.exp %15 : vector<8x8xf32>
    %cst_12 = arith.constant dense<0.000000e+00> : vector<8xf32>
    %17 = vector.multi_reduction <add>, %16, %cst_12 [1] : vector<8x8xf32> to vector<8xf32>
    %18 = vector.shape_cast %17 : vector<8xf32> to vector<8x1xf32>
    %19 = tpu.reciprocal %18 {approx = true} : vector<8x1xf32> -> vector<8x1xf32>
    %20 = vector.broadcast %19 : vector<8x1xf32> to vector<8x8xf32>
    %21 = arith.mulf %16, %20 : vector<8x8xf32>
    %c0_13 = arith.constant 0 : index
    %c0_14 = arith.constant 0 : index
    %c0_15 = arith.constant 0 : index
    %22 = vector.load %arg5[%c0_13, %c0_14, %c0_15] : memref<1x8x8xf32, #tpu.memory_space<vmem>>, vector<1x8x8xf32>
    %23 = vector.shape_cast %22 : vector<1x8x8xf32> to vector<8x8xf32>
    %24 = vector.shape_cast %21 : vector<8x8xf32> to vector<1x8x8xf32>
    tpu.vector_store %arg5[%c0_13, %c0_14, %c0_15], %24 {strides = array<i32>} : memref<1x8x8xf32, #tpu.memory_space<vmem>>, vector<1x8x8xf32>,
    return
  }
  func.func @transform_0(%arg0: i32, %arg1: i32) -> (i32, i32, i32) {
    %c0_i32 = arith.constant 0 : i32
    %c0_i32_0 = arith.constant 0 : i32
    return %arg0, %arg1, %c0_i32 : i32, i32, i32
  }
  func.func @transform_1(%arg0: i32, %arg1: i32) -> (i32, i32, i32) {
    %c0_i32 = arith.constant 0 : i32
    %c0_i32_0 = arith.constant 0 : i32
    %c0_i32_1 = arith.constant 0 : i32
    return %arg0, %c0_i32, %c0_i32_0 : i32, i32, i32
  }
  func.func @transform_2(%arg0: i32, %arg1: i32) -> (i32, i32, i32) {
    %c0_i32 = arith.constant 0 : i32
    %c0_i32_0 = arith.constant 0 : i32
    return %arg0, %arg1, %c0_i32 : i32, i32, i32
  }
  func.func @transform_3(%arg0: i32, %arg1: i32) -> (i32, i32, i32) {
    %c0_i32 = arith.constant 0 : i32
    %c0_i32_0 = arith.constant 0 : i32
    return %arg0, %arg1, %c0_i32 : i32, i32, i32
  }
}

</mosaic_0001>

<llo_original>
// kernel: scaled_dot_product_attn.1
$region0: #{scaled_dot_product_attn.1}
  #allocation0 [shape = 'u32[]', space=smem, size = 0x4, offset = 0x4, fixed_abs, tag = 'smem constant byte address 0x4 - core index']
  #allocation1 [shape = 'u32[144,128]{1,0:T(1,128)}', space=vmem, size = 0x12000, scoped, tag = 'internal scratch']
  %s0 = inlined_call_operand.vmem [shape: f32[4,8,32], index: 0, kind: input, shape index: {}]
  %s1 = inlined_call_operand.hbm [shape: f32[4,8,32], index: 1, kind: input, shape index: {}]
  %s2 = inlined_call_operand.vmem [shape: s32[4,8,8], index: 2, kind: input, shape index: {}]
  %s3 = inlined_call_operand.hbm [shape: f32[4,8,8], index: 3, kind: output, shape index: {}]
  %s4 = sld [smem:[#allocation0]]
  $region49: #{scaled_dot_product_attn.1} parent=0
    _
  %s6 = ssub.s32 1, %s4
  %s7 = scalar_select 0, %s6, %s4
  $region1: #{scaled_dot_product_attn.1} parent=0
    #allocation2 [shape = 'u8[8192]{0}', space=vmem, size = 0x2000, scoped, tag = 'input window, operand 1']
    #allocation3 [shape = 's32[2]{0}', space=sflag, size = 0x8, scoped, tag = 'scoped memory for scaled_dot_product_attn.1']
    #allocation4 [shape = 's32[2]{0}', space=sflag, size = 0x8, scoped, tag = 'scoped memory for scaled_dot_product_attn.1']
    #allocation5 [shape = 'u8[8192]{0}', space=vmem, size = 0x2000, scoped, tag = 'output window, operand 0']
    %8 = vsyncpa [#allocation3], 0
    %s9 = scalar_lea.sflag [#allocation3], 1
    %10 = vsyncpa %s9, 0
    %11 = vsyncpa [#allocation4], 0
    %s12 = scalar_lea.sflag [#allocation4], 1
    %13 = vsyncpa %s12, 0
    loop: start=0, step=1, limit=6
    $region2: #{scaled_dot_product_attn.1} parent=1 // loop_pre_header
      _
    $region3: #{scaled_dot_product_attn.1} parent=1 // loop_header
      %s15 = sphi 0, %s19
      %p16 = scmp.ge.s32.totalorder %s15, 6
      %s22 = sphi 0, %s34
      %s23 = sphi 0, %s30
      %s24 = sphi 0, %s22
      %s25 = sphi 0, %s23
      %s26 = sphi 0, %s24
      %s27 = sphi 0, %s25
      %s39 = sphi 0, %s41
      %s42 = sphi 0, %s39
      %s43 = sphi 0, %s42
      %s59 = sphi 0, %s43
      %s65 = sphi 0, %s67
      %s68 = sphi 0, %s65
      %s69 = sphi 0, %s68
      %s85 = sphi 0, %s69
      %s93 = sphi 0, %s95
      %s96 = sphi 0, %s93
      %s97 = sphi 0, %s96
      %s113 = sphi 0, %s97
      %s121 = sphi 0, %s123
      %s124 = sphi 0, %s121
      %s125 = sphi 0, %s124
      %s141 = sphi 0, %s125
    $region4: #{scaled_dot_product_attn.1} parent=1 // loop_header_branch
      %18 = sbr.rel (%p16) target = $region8
    $region5: #{scaled_dot_product_attn.1} parent=1 // loop_body
      %s20 = ssub.s32 %s15, 1
      %s21 = ssub.s32 %s15, 2
      %s28 = sadd.s32 1, %s23
      %p29 = scmp.ge.s32.totalorder %s28, 1
      %s30 = scalar_select %p29, 0, %s28
      %s31 = sadd.s32 1, %s22
      %s32 = scalar_select %p29, %s31, %s22
      %p33 = scmp.ge.s32.totalorder %s32, 4
      %s34 = scalar_select %p33, 0, %s32
      %s35 = ssub.s32 %s22, %s34
      %s36 = ssub.s32 %s23, %s30
      %s37 = sor.u32 %s35, %s36
      %p38 = scmp.eq.s32.totalorder %s37, 0
      %s40 = sadd.s32 %s39, 1
      %s41 = scalar_select %p38, %s39, %s40
      %p44 = pneg %p38
      %p45 = scmp.eq.s32.totalorder %s15, 3
      %p46 = por %p44, %p45
      %p47 = scmp.ne.s32.totalorder %s39, %s42
      %p48 = scmp.eq.s32.totalorder %s15, 0
      %p49 = por %p47, %p48
      %p50 = scmp.ne.s32.totalorder %s39, %s42
      %p51 = scmp.eq.s32.totalorder %s20, 3
      %p52 = por %p50, %p51
      %p53 = scmp.ne.s32.totalorder %s42, %s43
      %p54 = scmp.eq.s32.totalorder %s20, 0
      %p55 = por %p53, %p54
      %p56 = scmp.ne.s32.totalorder %s42, %s43
      %p57 = scmp.eq.s32.totalorder %s21, 3
      %p58 = por %p56, %p57
      %p60 = scmp.ne.s32.totalorder %s43, %s59
      %p61 = scmp.eq.s32.totalorder %s21, 0
      %p62 = por %p60, %p61
      %s63 = ssub.s32 %s22, %s34
      %p64 = scmp.eq.s32.totalorder %s63, 0
      %s66 = sadd.s32 %s65, 1
      %s67 = scalar_select %p64, %s65, %s66
      %p70 = pneg %p64
      %p71 = scmp.eq.s32.totalorder %s15, 3
      %p72 = por %p70, %p71
      %p73 = scmp.ne.s32.totalorder %s65, %s68
      %p74 = scmp.eq.s32.totalorder %s15, 0
      %p75 = por %p73, %p74
      %p76 = scmp.ne.s32.totalorder %s65, %s68
      %p77 = scmp.eq.s32.totalorder %s20, 3
      %p78 = por %p76, %p77
      %p79 = scmp.ne.s32.totalorder %s68, %s69
      %p80 = scmp.eq.s32.totalorder %s20, 0
      %p81 = por %p79, %p80
      %p82 = scmp.ne.s32.totalorder %s68, %s69
      %p83 = scmp.eq.s32.totalorder %s21, 3
      %p84 = por %p82, %p83
      %p86 = scmp.ne.s32.totalorder %s69, %s85
      %p87 = scmp.eq.s32.totalorder %s21, 0
      %p88 = por %p86, %p87
      %s89 = ssub.s32 %s22, %s34
      %s90 = ssub.s32 %s23, %s30
      %s91 = sor.u32 %s89, %s90
      %p92 = scmp.eq.s32.totalorder %s91, 0
      %s94 = sadd.s32 %s93, 1
      %s95 = scalar_select %p92, %s93, %s94
      %p98 = pneg %p92
      %p99 = scmp.eq.s32.totalorder %s15, 3
      %p100 = por %p98, %p99
      %p101 = scmp.ne.s32.totalorder %s93, %s96
      %p102 = scmp.eq.s32.totalorder %s15, 0
      %p103 = por %p101, %p102
      %p104 = scmp.ne.s32.totalorder %s93, %s96
      %p105 = scmp.eq.s32.totalorder %s20, 3
      %p106 = por %p104, %p105
      %p107 = scmp.ne.s32.totalorder %s96, %s97
      %p108 = scmp.eq.s32.totalorder %s20, 0
      %p109 = por %p107, %p108
      %p110 = scmp.ne.s32.totalorder %s96, %s97
      %p111 = scmp.eq.s32.totalorder %s21, 3
      %p112 = por %p110, %p111
      %p114 = scmp.ne.s32.totalorder %s97, %s113
      %p115 = scmp.eq.s32.totalorder %s21, 0
      %p116 = por %p114, %p115
      %s117 = ssub.s32 %s22, %s34
      %s118 = ssub.s32 %s23, %s30
      %s119 = sor.u32 %s117, %s118
      %p120 = scmp.eq.s32.totalorder %s119, 0
      %s122 = sadd.s32 %s121, 1
      %s123 = scalar_select %p120, %s121, %s122
      %p126 = pneg %p120
      %p127 = scmp.eq.s32.totalorder %s15, 3
      %p128 = por %p126, %p127
      %p129 = scmp.ne.s32.totalorder %s121, %s124
      %p130 = scmp.eq.s32.totalorder %s15, 0
      %p131 = por %p129, %p130
      %p132 = scmp.ne.s32.totalorder %s121, %s124
      %p133 = scmp.eq.s32.totalorder %s20, 3
      %p134 = por %p132, %p133
      %p135 = scmp.ne.s32.totalorder %s124, %s125
      %p136 = scmp.eq.s32.totalorder %s20, 0
      %p137 = por %p135, %p136
      %p138 = scmp.ne.s32.totalorder %s124, %s125
      %p139 = scmp.eq.s32.totalorder %s21, 3
      %p140 = por %p138, %p139
      %p142 = scmp.ne.s32.totalorder %s125, %s141
      %p143 = scmp.eq.s32.totalorder %s21, 0
      %p144 = por %p142, %p143
      %p145 = scmp.le.s32.totalorder 1, %s15
      %p146 = scmp.lt.s32.totalorder %s15, 5
      %p147 = pnand %p145, %p146
      %p148 = pneg %p147
      // Predicated region
      $region9: #{scaled_dot_product_attn.1} parent=5 // pred_check
        _
      $region10: #{scaled_dot_product_attn.1} parent=5 // pred_check_branch
        %150 = sbr.rel (%p147) target = $region12
      $region11: #{scaled_dot_product_attn.1} parent=5 // pred_region
        %s151 = ssub.s32 %s15, 1
      $region12: #{scaled_dot_product_attn.1} parent=5 // pred_fallthru
        _
      %p152 = scmp.lt.s32.totalorder %s15, 4
      // Predicated region
      $region13: #{scaled_dot_product_attn.1} parent=5 // pred_check
        %p153 = pneg %p152
      $region14: #{scaled_dot_product_attn.1} parent=5 // pred_check_branch
        %155 = sbr.rel (%p153) target = $region16
      $region15: #{scaled_dot_product_attn.1} parent=5 // pred_region
        // Predicated region
        $region17: #{scaled_dot_product_attn.1} parent=15 // pred_check
          %p156 = pneg %p49
        $region18: #{scaled_dot_product_attn.1} parent=15 // pred_check_branch
          %158 = sbr.rel (%p156) target = $region20
        $region19: #{scaled_dot_product_attn.1} parent=15 // pred_region
          %p159 = scmp.lt.s32.totalorder %s22, 3
          %s160 = scalar_select %p159, %s22, 3
          %p161 = scmp.lt.s32.totalorder %s23, 0
          %s162 = scalar_select %p161, %s23, 0
          %s163 = sadd.s32 %s162, %s160
          %s164 = smul.addr %s163, 8
          %s165 = scalar_lea.vmem %s0, %s164
        $region20: #{scaled_dot_product_attn.1} parent=15 // pred_fallthru
          _
        // Predicated region
        $region21: #{scaled_dot_product_attn.1} parent=15 // pred_check
          %p166 = pneg %p75
        $region22: #{scaled_dot_product_attn.1} parent=15 // pred_check_branch
          %168 = sbr.rel (%p166) target = $region24
        $region23: #{scaled_dot_product_attn.1} parent=15 // pred_region
          %s169 = sand.u32 %s65, 1
          %s170 = scalar_lea.sflag [#allocation3], %s169
          %s171 = sand.u32 %s65, 1
          %s172 = smul.addr %s171, 8
          %s173 = scalar_lea.vmem [#allocation2], %s172
          %s175 = ssub.s32 128, 128
          %176 = vsyncadd %s170, %s175
          %s177 = smul.addr %s22, 128
          %s178 = scalar_lea.hbm %s1, %s177
          %s180 = sshll.u32 %s173, 4
          %s181 = int_to_ptr.vmem [resolvable:$true] %s180
          %183 = dma.hbm_to_vmem [thread:$0]  %s178, 128, %s181, %s170
        $region24: #{scaled_dot_product_attn.1} parent=15 // pred_fallthru
          _
        // Predicated region
        $region25: #{scaled_dot_product_attn.1} parent=15 // pred_check
          %p184 = pneg %p103
        $region26: #{scaled_dot_product_attn.1} parent=15 // pred_check_branch
          %186 = sbr.rel (%p184) target = $region28
        $region27: #{scaled_dot_product_attn.1} parent=15 // pred_region
          %p187 = scmp.lt.s32.totalorder %s22, 3
          %s188 = scalar_select %p187, %s22, 3
          %p189 = scmp.lt.s32.totalorder %s23, 0
          %s190 = scalar_select %p189, %s23, 0
          %s191 = sadd.s32 %s190, %s188
          %s192 = smul.addr %s191, 8
          %s193 = scalar_lea.vmem %s2, %s192
        $region28: #{scaled_dot_product_attn.1} parent=15 // pred_fallthru
          _
      $region16: #{scaled_dot_product_attn.1} parent=5 // pred_fallthru
        _
      %p194 = scmp.le.s32.totalorder 1, %s15
      %p195 = scmp.lt.s32.totalorder %s15, 5
      %p196 = pnand %p194, %p195
      %p197 = pneg %p196
      // Predicated region
      $region29: #{scaled_dot_product_attn.1} parent=5 // pred_check
        _
      $region30: #{scaled_dot_product_attn.1} parent=5 // pred_check_branch
        %199 = sbr.rel (%p196) target = $region32
      $region31: #{scaled_dot_product_attn.1} parent=5 // pred_region
        %s200 = ssub.s32 %s15, 1
        %s201 = sand.u32 %s68, 1
        %s202 = scalar_lea.sflag [#allocation3], %s201
        %s203 = sand.u32 %s68, 1
        %s204 = smul.addr %s203, 8
        %s205 = scalar_lea.vmem [#allocation2], %s204
        // Predicated region
        $region33: #{scaled_dot_product_attn.1} parent=31 // pred_check
          %p206 = pneg %p81
        $region34: #{scaled_dot_product_attn.1} parent=31 // pred_check_branch
          %208 = sbr.rel (%p206) target = $region36
        $region35: #{scaled_dot_product_attn.1} parent=31 // pred_region
          %209 = dma.done %s202, 128
        $region36: #{scaled_dot_product_attn.1} parent=31 // pred_fallthru
          _
        %p210 = scmp.lt.s32.totalorder %s24, 3
        %s211 = scalar_select %p210, %s24, 3
        %p212 = scmp.lt.s32.totalorder %s25, 0
        %s213 = scalar_select %p212, %s25, 0
        %s214 = sadd.s32 %s213, %s211
        %s215 = smul.addr %s214, 8
        %s216 = scalar_lea.vmem %s0, %s215
        %p217 = pneg %p55
        %p218 = pneg %p52
        %s219 = sand.u32 %s68, 1
        %s220 = scalar_lea.sflag [#allocation3], %s219
        %s221 = sand.u32 %s68, 1
        %s222 = smul.addr %s221, 8
        %s223 = scalar_lea.vmem [#allocation2], %s222
        %p224 = pneg %p81
        %p225 = pneg %p78
        %p226 = scmp.lt.s32.totalorder %s24, 3
        %s227 = scalar_select %p226, %s24, 3
        %p228 = scmp.lt.s32.totalorder %s25, 0
        %s229 = scalar_select %p228, %s25, 0
        %s230 = sadd.s32 %s229, %s227
        %s231 = smul.addr %s230, 8
        %s232 = scalar_lea.vmem %s2, %s231
        %p233 = pneg %p109
        %p234 = pneg %p106
        %p235 = pneg %p137
        %p236 = pneg %p134
        %s237 = sand.u32 %s124, 1
        %s238 = scalar_lea.sflag [#allocation4], %s237
        %s239 = sand.u32 %s124, 1
        %s240 = smul.addr %s239, 8
        %s241 = scalar_lea.vmem [#allocation5], %s240
        %p242 = scmp.lt.s32.totalorder %s24, 3
        %s243 = scalar_select %p242, %s24, 3
        %p244 = scmp.lt.s32.totalorder %s25, 0
        %s245 = scalar_select %p244, %s25, 0
        %s246 = sadd.s32 %s245, %s243
        %s247 = smul.addr %s246, 8
        %s248 = scalar_lea.vmem %s0, %s247
        %p249 = scmp.lt.s32.totalorder %s24, 3
        %s250 = scalar_select %p249, %s24, 3
        %p251 = scmp.lt.s32.totalorder %s25, 0
        %s252 = scalar_select %p251, %s25, 0
        %s253 = sadd.s32 %s252, %s250
        %s254 = smul.addr %s253, 8
        %s255 = scalar_lea.vmem %s2, %s254
        %v256 = vld [vmem:[%s248] sm:$0xff]
        %v257 = vmul.f32 %v256, 0.17677669
        %v258 = vld [vmem:[%s205] sm:$0xff]
        %vm259 = vcmask 261120
        %v261 = vsel %vm259, %v257, 0
        %v264 = vsel %vm259, %v258, 0
        %266 = vmatprep.subr.mxu0 0.0
        %267 = vmatpush1.xpose.msra.mxu0 %v264
        %268 = vmatprep.subr.mxu0 0.0
        %269 = vmatpush1.xpose.msra.mxu0 0.0
        %270 = vmatprep.subr.mxu0 0.0
        %271 = vmatpush1.xpose.msra.mxu0 0.0
        %272 = vmatprep.subr.mxu0 0.0
        %273 = vmatpush1.xpose.msra.mxu0 0.0
        %274 = vmatprep.subr.mxu0 0.0
        %275 = vmatpush1.xpose.msra.mxu0 0.0
        %276 = vmatprep.subr.mxu0 0.0
        %277 = vmatpush1.xpose.msra.mxu0 0.0
        %278 = vmatprep.subr.mxu0 0.0
        %279 = vmatpush1.xpose.msra.mxu0 0.0
        %280 = vmatprep.subr.mxu0 0.0
        %281 = vmatpush1.xpose.msra.mxu0 0.0
        %282 = vmatprep.subr.mxu0 0.0
        %283 = vmatpush1.xpose.msra.mxu0 0.0
        %284 = vmatprep.subr.mxu0 0.0
        %285 = vmatpush1.xpose.msra.mxu0 0.0
        %286 = vmatprep.subr.mxu0 0.0
        %287 = vmatpush1.xpose.msra.mxu0 0.0
        %288 = vmatprep.subr.mxu0 0.0
        %289 = vmatpush1.xpose.msra.mxu0 0.0
        %290 = vmatprep.subr.mxu0 0.0
        %291 = vmatpush1.xpose.msra.mxu0 0.0
        %292 = vmatprep.subr.mxu0 0.0
        %293 = vmatpush1.xpose.msra.mxu0 0.0
        %294 = vmatprep.subr.mxu0 0.0
        %295 = vmatpush1.xpose.msra.mxu0 0.0
        %296 = vmatprep.subr.mxu0 0.0
        %297 = vmatpush1.xpose.msra.mxu0 0.0
        %298 = vmatprep.subr.mxu0 0.0
        %299 = vmatpush1.xpose.msra.mxu0 0.0
        %300 = vmatprep.subr.mxu0 0.0
        %301 = vmatpush1.xpose.msra.mxu0 0.0
        %302 = vmatprep.subr.mxu0 0.0
        %303 = vmatpush1.xpose.msra.mxu0 0.0
        %304 = vmatprep.subr.mxu0 0.0
        %305 = vmatpush1.xpose.msra.mxu0 0.0
        %306 = vmatprep.subr.mxu0 0.0
        %307 = vmatpush1.xpose.msra.mxu0 0.0
        %308 = vmatprep.subr.mxu0 0.0
        %309 = vmatpush1.xpose.msra.mxu0 0.0
        %310 = vmatprep.subr.mxu0 0.0
        %311 = vmatpush1.xpose.msra.mxu0 0.0
        %312 = vmatprep.subr.mxu0 0.0
        %313 = vmatpush1.xpose.msra.mxu0 0.0
        %314 = vmatprep.subr.mxu0 0.0
        %315 = vmatpush1.xpose.msra.mxu0 0.0
        %316 = vmatprep.subr.mxu0 0.0
        %317 = vmatpush1.xpose.msra.mxu0 0.0
        %318 = vmatprep.subr.mxu0 0.0
        %319 = vmatpush1.xpose.msra.mxu0 0.0
        %320 = vmatprep.subr.mxu0 0.0
        %321 = vmatpush1.xpose.msra.mxu0 0.0
        %322 = vmatprep.subr.mxu0 0.0
        %323 = vmatpush1.xpose.msra.mxu0 0.0
        %324 = vmatprep.subr.mxu0 0.0
        %325 = vmatpush1.xpose.msra.mxu0 0.0
        %326 = vmatprep.subr.mxu0 0.0
        %327 = vmatpush1.xpose.msra.mxu0 0.0
        %328 = vmatprep.subr.mxu0 0.0
        %329 = vmatpush1.xpose.msra.mxu0 0.0
        %330 = vmatprep.mubr.f32.mxu0 0.0
        %331 = vmatmul.mubr.f32.gmra.mrb[0].mxu0 %v261
        %v332 = vpop.f32.mrb[0].mxu0
        %v333 = vadd.f32 0.0, %v332
        %v334 = vpop.f32.mrb[0].mxu0
        %335 = vdwg.mxu0
        %v336 = vld [vmem:[%s255] sm:$0xff]
        %vm337 = vcmp.ne.s32.totalorder %v336, 0
        %v338 = vsel %vm337, %v333, -1e+30
        %vm339 = vcmask 64512
        %v340 = vsel %vm339, %v338, -inf
        %341 = vmax.xlane.f32.xlu0 %v340
        %v342 = vpop.xlane.xlu0 %341
        %v343 = vsub.f32 %v338, %v342
        %v344 = vmul.f32 %v343, 1.442695
        %v345 = vpow.pop %v344
        %v346 = vsel %vm339, %v345, 0.0
        %347 = vadd.xlane.f32.xlu0 %v346
        %v348 = vpop.xlane.xlu0 %347
        %v349 = vrcp.pop %v348
        %v350 = vmul.f32 %v345, %v349
        %351 = vst.msk [vmem:[%s241] sm:$0xff] %vm339, %v350
        %s352 = sand.u32 %s124, 1
        %s353 = scalar_lea.sflag [#allocation4], %s352
        %s354 = sand.u32 %s124, 1
        %s355 = smul.addr %s354, 8
        %s356 = scalar_lea.vmem [#allocation5], %s355
        // Predicated region
        $region37: #{scaled_dot_product_attn.1} parent=31 // pred_check
          %p357 = pneg %p134
        $region38: #{scaled_dot_product_attn.1} parent=31 // pred_check_branch
          %359 = sbr.rel (%p357) target = $region40
        $region39: #{scaled_dot_product_attn.1} parent=31 // pred_region
          %s361 = ssub.s32 128, 128
          %362 = vsyncadd %s353, %s361
          %s363 = sadd.s32 %s25, %s24
          %s364 = smul.addr %s363, 128
          %s365 = scalar_lea.hbm %s3, %s364
          %s367 = sshll.u32 %s356, 4
          %s368 = int_to_ptr.vmem [resolvable:$true] %s367
          %370 = dma.vmem_to_hbm [thread:$0]  %s368, 128, %s365, %s353
        $region40: #{scaled_dot_product_attn.1} parent=31 // pred_fallthru
          _
      $region32: #{scaled_dot_product_attn.1} parent=5 // pred_fallthru
        _
      %p371 = scmp.le.s32.totalorder 2, %s15
      // Predicated region
      $region41: #{scaled_dot_product_attn.1} parent=5 // pred_check
        %p372 = pneg %p371
      $region42: #{scaled_dot_product_attn.1} parent=5 // pred_check_branch
        %374 = sbr.rel (%p372) target = $region44
      $region43: #{scaled_dot_product_attn.1} parent=5 // pred_region
        %s375 = ssub.s32 %s15, 2
        // Predicated region
        $region45: #{scaled_dot_product_attn.1} parent=43 // pred_check
          %p376 = pneg %p140
        $region46: #{scaled_dot_product_attn.1} parent=43 // pred_check_branch
          %378 = sbr.rel (%p376) target = $region48
        $region47: #{scaled_dot_product_attn.1} parent=43 // pred_region
          %s379 = sand.u32 %s125, 1
          %s380 = scalar_lea.sflag [#allocation4], %s379
          %s381 = sand.u32 %s125, 1
          %s382 = smul.addr %s381, 8
          %s383 = scalar_lea.vmem [#allocation5], %s382
          %384 = dma.done %s380, 128
        $region48: #{scaled_dot_product_attn.1} parent=43 // pred_fallthru
          _
      $region44: #{scaled_dot_product_attn.1} parent=5 // pred_fallthru
        _
    $region6: #{scaled_dot_product_attn.1} parent=1 // loop_footer
      %s19 = sadd.s32 1, %s15
    $region7: #{scaled_dot_product_attn.1} parent=1 // loop_footer_branch
      %14 = sbr.rel target = $region3
    $region8: #{scaled_dot_product_attn.1} parent=1 // loop_exit
      _
    %385 = vsyncpa [#allocation3], 1
    %s386 = scalar_lea.sflag [#allocation3], 1
    %387 = vsyncpa %s386, 1
    %388 = vsyncpa [#allocation4], 1
    %s389 = scalar_lea.sflag [#allocation4], 1
    %390 = vsyncpa %s389, 1

</llo_original>
